<compile_context>
chip_gen: v6e
topology: v6e:2x2x1
jax: 0.10.0
libtpu: 0.0.40
codegen_flags: <defaults>
</compile_context>

<pallas_src>
import functools

import jax
import jax.numpy as jnp
from jax.experimental import pallas as pl
from jax.experimental.pallas import tpu as pltpu


def _round_up(n, m):
    return ((n + m - 1) // m) * m


def _vae_encoder_kernel(x_ref, wh_ref, bh_ref, w2_ref, b2_ref, out_ref):
    # x_hidden = tanh(x @ Wh + bh)   (bf16 inputs, f32 accumulation / bias / tanh)
    x = x_ref[...]                                            # [bb, in]  bf16
    h = jnp.tanh(
        jnp.dot(x, wh_ref[...], preferred_element_type=jnp.float32) + bh_ref[...]
    )                                                         # [bb, hidden] f32
    # [mean || log_var || 0-pad] = h @ [Wm || Wv || 0] + [bm || bv || 0]
    fused = (
        jnp.dot(h.astype(jnp.bfloat16), w2_ref[...],
                preferred_element_type=jnp.float32)
        + b2_ref[...]
    )                                                         # [bb, out_pad] f32
    out_ref[...] = fused.astype(out_ref.dtype)


@functools.partial(jax.jit, static_argnames=("block_b",))
def vae_encoder(x, wh, bh, wm, bm, wv, bv, *, block_b=256):
    """x: [B, input_dim]. Returns (mean, log_var), each [B, latent_dim] float32."""
    B, input_dim = x.shape
    hidden_dim = wh.shape[1]
    latent_dim = wm.shape[1]
    assert block_b % 8 == 0, "block_b must be a multiple of 8 (sublane granularity)"

    # --- fuse FC_mean / FC_var and pad the output axis to a lane-dense width ---
    out_w = 2 * latent_dim
    out_pad = _round_up(out_w, 128)
    w2 = jnp.pad(jnp.concatenate([wm, wv], axis=1), ((0, 0), (0, out_pad - out_w)))
    b2 = jnp.pad(jnp.concatenate([bm, bv], axis=1), ((0, 0), (0, out_pad - out_w)))

    # --- dtype plumbing: bf16 streams into the MXU, f32 biases / accumulation ---
    x_bf = x.astype(jnp.bfloat16)
    wh_bf = wh.astype(jnp.bfloat16)
    w2_bf = w2.astype(jnp.bfloat16)
    bh_f32 = bh.astype(jnp.float32)
    b2_f32 = b2.astype(jnp.float32)

    # --- batch tiling: big tiles, pad batch to a multiple of the tile ---
    bb = min(block_b, _round_up(B, 8))
    b_padded = _round_up(B, bb)
    if b_padded != B:
        x_bf = jnp.pad(x_bf, ((0, b_padded - B), (0, 0)))
    grid = (b_padded // bb,)

    # --- explicit VMEM budget (double-buffered x + output tiles + small params) ---
    vmem_est = (
        2 * bb * input_dim * 2                       # x tiles (bf16, 2 buffers)
        + 2 * bb * out_pad * 4                       # output tiles (f32, 2 buffers)
        + 2 * (input_dim * hidden_dim * 2 + hidden_dim * 4
               + hidden_dim * out_pad * 2 + out_pad * 4)
    )
    vmem_limit = int(min(48 * 2**20, max(8 * 2**20, 4 * vmem_est)))

    # Weights / biases have a constant block index so Pallas does not re-DMA them
    # per step; batch (x / output) is the only tiled axis.
    x_spec = pl.BlockSpec((bb, input_dim), lambda i: (i, 0))
    wh_spec = pl.BlockSpec((input_dim, hidden_dim), lambda i: (0, 0))
    bh_spec = pl.BlockSpec((1, hidden_dim), lambda i: (0, 0))
    w2_spec = pl.BlockSpec((hidden_dim, out_pad), lambda i: (0, 0))
    b2_spec = pl.BlockSpec((1, out_pad), lambda i: (0, 0))
    out_spec = pl.BlockSpec((bb, out_pad), lambda i: (i, 0))

    fused = pl.pallas_call(
        _vae_encoder_kernel,
        out_shape=jax.ShapeDtypeStruct((b_padded, out_pad), jnp.float32),
        grid_spec=pltpu.PrefetchScalarGridSpec(
            num_scalar_prefetch=0,
            grid=grid,
            in_specs=[x_spec, wh_spec, bh_spec, w2_spec, b2_spec],
            out_specs=out_spec,
        ),
        compiler_params=pltpu.CompilerParams(
            dimension_semantics=("parallel",),
            vmem_limit_bytes=vmem_limit,
        ),
    )(x_bf, wh_bf, bh_f32, w2_bf, b2_f32)

    fused = fused[:B]
    mean = fused[:, :latent_dim]
    log_var = fused[:, latent_dim:out_w]
    return mean, log_var


def _trunc_normal(key, shape, std=0.01):
    # torch.nn.init.trunc_normal_(w, 0, 0.01) truncates at +/- 2*std.
    return std * jax.random.truncated_normal(key, -2.0, 2.0, shape, jnp.float32)


def init_params(key, input_dim, latent_dim, hidden_dim=32):
    k1, k2, k3 = jax.random.split(key, 3)
    # Stored as [in, out] (i.e. PyTorch weight transposed).
    wh = _trunc_normal(k1, (input_dim, hidden_dim))
    bh = jnp.zeros((1, hidden_dim), jnp.float32)
    wm = _trunc_normal(k2, (hidden_dim, latent_dim))
    bm = jnp.zeros((1, latent_dim), jnp.float32)
    wv = _trunc_normal(k3, (hidden_dim, latent_dim))
    bv = jnp.zeros((1, latent_dim), jnp.float32)
    return wh, bh, wm, bm, wv, bv


if __name__ == "__main__":
    # Small but non-trivial shapes: 2 grid steps at block_b=256 (keeps both v7x
    # TensorCores busy), latent padded 16 -> 128 lanes inside the kernel.
    B, input_dim, hidden_dim, latent_dim = 512, 16, 32, 8

    key = jax.random.PRNGKey(0)
    kx, kp = jax.random.split(key)
    x = jax.random.normal(kx, (B, input_dim), jnp.float32)
    params = init_params(kp, input_dim, latent_dim, hidden_dim)

    mean, log_var = vae_encoder(x, *params, block_b=256)
    jax.block_until_ready((mean, log_var))

    # Reference check (same bf16 input/weight casts as the kernel, f32 accumulation).
    wh, bh, wm, bm, wv, bv = params
    xb = x.astype(jnp.bfloat16)
    h_ref = jnp.tanh(
        jnp.dot(xb, wh.astype(jnp.bfloat16), preferred_element_type=jnp.float32) + bh
    )
    hb = h_ref.astype(jnp.bfloat16)
    mean_ref = jnp.dot(hb, wm.astype(jnp.bfloat16),
                       preferred_element_type=jnp.float32) + bm
    logvar_ref = jnp.dot(hb, wv.astype(jnp.bfloat16),
                         preferred_element_type=jnp.float32) + bv
    assert mean.shape == (B, latent_dim) and log_var.shape == (B, latent_dim)
    assert jnp.allclose(mean, mean_ref, atol=1e-4, rtol=1e-3)
    assert jnp.allclose(log_var, logvar_ref, atol=1e-4, rtol=1e-3)

    print("KERNEL_OK")
</pallas_src>

<mosaic_0001>
module attributes {stable_mosaic.version = 11 : i64} {
  func.func @_vae_encoder_kernel(%arg0: i32, %arg1: memref<256x16xbf16, #tpu.memory_space<vmem>>, %arg2: memref<16x32xbf16, #tpu.memory_space<vmem>>, %arg3: memref<1x32xf32, #tpu.memory_space<vmem>>, %arg4: memref<32x128xbf16, #tpu.memory_space<vmem>>, %arg5: memref<1x128xf32, #tpu.memory_space<vmem>>, %arg6: memref<256x128xf32, #tpu.memory_space<vmem>>) attributes {dimension_semantics = [#tpu.dimension_semantics<parallel>], iteration_bounds = array<i64: 2>, scalar_prefetch = 0 : i64, scratch_operands = 0 : i64, tpu.core_type = #tpu.core_type<tc>, window_params = [{transform_indices = @transform_0, window_bounds = array<i64: 256, 16>}, {pipeline_mode = #tpu.pipeline_mode<synchronous>, transform_indices = @transform_1, window_bounds = array<i64: 16, 32>}, {pipeline_mode = #tpu.pipeline_mode<synchronous>, transform_indices = @transform_2, window_bounds = array<i64: 1, 32>}, {pipeline_mode = #tpu.pipeline_mode<synchronous>, transform_indices = @transform_3, window_bounds = array<i64: 32, 128>}, {pipeline_mode = #tpu.pipeline_mode<synchronous>, transform_indices = @transform_4, window_bounds = array<i64: 1, 128>}, {transform_indices = @transform_5, window_bounds = array<i64: 256, 128>}]} {
    %c0 = arith.constant 0 : index
    %c0_0 = arith.constant 0 : index
    %0 = vector.load %arg1[%c0, %c0_0] : memref<256x16xbf16, #tpu.memory_space<vmem>>, vector<256x16xbf16>
    %c0_1 = arith.constant 0 : index
    %c0_2 = arith.constant 0 : index
    %1 = vector.load %arg2[%c0_1, %c0_2] : memref<16x32xbf16, #tpu.memory_space<vmem>>, vector<16x32xbf16>
    %cst = arith.constant dense<0.000000e+00> : vector<256x32xf32>
    %2 = tpu.matmul %0, %1, %cst {dimension_numbers = #tpu.dot_dimension_numbers<[1], [0], [0], [1], [0, 0, 1, 1], [], []>} : vector<256x16xbf16>, vector<16x32xbf16>, vector<256x32xf32> -> vector<256x32xf32>
    %c0_3 = arith.constant 0 : index
    %c0_4 = arith.constant 0 : index
    %3 = vector.load %arg3[%c0_3, %c0_4] : memref<1x32xf32, #tpu.memory_space<vmem>>, vector<1x32xf32>
    %4 = vector.broadcast %3 : vector<1x32xf32> to vector<256x32xf32>
    %5 = arith.addf %2, %4 : vector<256x32xf32>
    %6 = math.tanh %5 : vector<256x32xf32>
    %7 = arith.truncf %6 : vector<256x32xf32> to vector<256x32xbf16>
    %c0_5 = arith.constant 0 : index
    %c0_6 = arith.constant 0 : index
    %8 = vector.load %arg4[%c0_5, %c0_6] : memref<32x128xbf16, #tpu.memory_space<vmem>>, vector<32x128xbf16>
    %cst_7 = arith.constant dense<0.000000e+00> : vector<256x128xf32>
    %9 = tpu.matmul %7, %8, %cst_7 {dimension_numbers = #tpu.dot_dimension_numbers<[1], [0], [0], [1], [0, 0, 1, 1], [], []>} : vector<256x32xbf16>, vector<32x128xbf16>, vector<256x128xf32> -> vector<256x128xf32>
    %c0_8 = arith.constant 0 : index
    %c0_9 = arith.constant 0 : index
    %10 = vector.load %arg5[%c0_8, %c0_9] : memref<1x128xf32, #tpu.memory_space<vmem>>, vector<1x128xf32>
    %11 = vector.broadcast %10 : vector<1x128xf32> to vector<256x128xf32>
    %12 = arith.addf %9, %11 : vector<256x128xf32>
    %c0_10 = arith.constant 0 : index
    %c0_11 = arith.constant 0 : index
    %13 = vector.load %arg6[%c0_10, %c0_11] : memref<256x128xf32, #tpu.memory_space<vmem>>, vector<256x128xf32>
    tpu.vector_store %arg6[%c0_10, %c0_11], %12 {strides = array<i32>} : memref<256x128xf32, #tpu.memory_space<vmem>>, vector<256x128xf32>,
    return
  }
  func.func @transform_0(%arg0: i32) -> (i32, i32) {
    %c0_i32 = arith.constant 0 : i32
    %c0_i32_0 = arith.constant 0 : i32
    return %arg0, %c0_i32 : i32, i32
  }
  func.func @transform_1(%arg0: i32) -> (i32, i32) {
    %c0_i32 = arith.constant 0 : i32
    %c0_i32_0 = arith.constant 0 : i32
    %c0_i32_1 = arith.constant 0 : i32
    return %c0_i32, %c0_i32_0 : i32, i32
  }
  func.func @transform_2(%arg0: i32) -> (i32, i32) {
    %c0_i32 = arith.constant 0 : i32
    %c0_i32_0 = arith.constant 0 : i32
    %c0_i32_1 = arith.constant 0 : i32
    return %c0_i32, %c0_i32_0 : i32, i32
  }
  func.func @transform_3(%arg0: i32) -> (i32, i32) {
    %c0_i32 = arith.constant 0 : i32
    %c0_i32_0 = arith.constant 0 : i32
    %c0_i32_1 = arith.constant 0 : i32
    return %c0_i32, %c0_i32_0 : i32, i32
  }
  func.func @transform_4(%arg0: i32) -> (i32, i32) {
    %c0_i32 = arith.constant 0 : i32
    %c0_i32_0 = arith.constant 0 : i32
    %c0_i32_1 = arith.constant 0 : i32
    return %c0_i32, %c0_i32_0 : i32, i32
  }
  func.func @transform_5(%arg0: i32) -> (i32, i32) {
    %c0_i32 = arith.constant 0 : i32
    %c0_i32_0 = arith.constant 0 : i32
    return %arg0, %c0_i32 : i32, i32
  }
}

</mosaic_0001>

<llo_original>
// kernel: vae_encoder.1
$region0: #{vae_encoder.1}
  #allocation0 [shape = 'u32[]', space=smem, size = 0x4, offset = 0x4, fixed_abs, tag = 'smem constant byte address 0x4 - core index']
  #allocation1 [shape = 'u32[144,128]{1,0:T(1,128)}', space=vmem, size = 0x12000, scoped, tag = 'internal scratch']
  %s0 = inlined_call_operand.vmem [shape: bf16[512,16], index: 0, kind: input, shape index: {}]
  %s1 = inlined_call_operand.vmem [shape: bf16[16,32], index: 1, kind: input, shape index: {}]
  %s2 = inlined_call_operand.vmem [shape: f32[1,32], index: 2, kind: input, shape index: {}]
  %s3 = inlined_call_operand.vmem [shape: bf16[32,128], index: 3, kind: input, shape index: {}]
  %s4 = inlined_call_operand.vmem [shape: f32[1,128], index: 4, kind: input, shape index: {}]
  %s5 = inlined_call_operand.vmem [shape: f32[512,128], index: 5, kind: output, shape index: {}]
  %s6 = sld [smem:[#allocation0]]
  $region53: #{vae_encoder.1} parent=0
    _
  %s8 = ssub.s32 1, %s6
  %s9 = scalar_select 0, %s8, %s6
  loop: start=0, step=1, limit=4
  $region2: #{vae_encoder.1} parent=0 // loop_pre_header
    _
  $region3: #{vae_encoder.1} parent=0 // loop_header
    %s11 = sphi 0, %s15
    %p12 = scmp.ge.s32.totalorder %s11, 4
    %s21 = sphi 0, %s23
    %s24 = sphi 0, %s21
    %s25 = sphi 0, %s24
    %s41 = sphi 0, %s25
    %s45 = sphi 0, %s45
    %s47 = sphi 0, %s45
    %s48 = sphi 0, %s47
    %s62 = sphi 0, %s48
    %s66 = sphi 0, %s66
    %s68 = sphi 0, %s66
    %s69 = sphi 0, %s68
    %s83 = sphi 0, %s69
    %s87 = sphi 0, %s87
    %s89 = sphi 0, %s87
    %s90 = sphi 0, %s89
    %s104 = sphi 0, %s90
    %s108 = sphi 0, %s108
    %s110 = sphi 0, %s108
    %s111 = sphi 0, %s110
    %s125 = sphi 0, %s111
    %s131 = sphi 0, %s133
    %s134 = sphi 0, %s131
    %s135 = sphi 0, %s134
    %s151 = sphi 0, %s135
  $region4: #{vae_encoder.1} parent=0 // loop_header_branch
    %14 = sbr.rel (%p12) target = $region8
  $region5: #{vae_encoder.1} parent=0 // loop_body
    %s16 = ssub.s32 %s11, 1
    %s17 = ssub.s32 %s11, 2
    %s18 = sadd.s32 %s11, 1
    %s19 = ssub.s32 %s11, %s18
    %p20 = scmp.eq.s32.totalorder %s19, 0
    %s22 = sadd.s32 %s21, 1
    %s23 = scalar_select %p20, %s21, %s22
    %p26 = pneg %p20
    %p27 = scmp.eq.s32.totalorder %s11, 1
    %p28 = por %p26, %p27
    %p29 = scmp.ne.s32.totalorder %s21, %s24
    %p30 = scmp.eq.s32.totalorder %s11, 0
    %p31 = por %p29, %p30
    %p32 = scmp.ne.s32.totalorder %s21, %s24
    %p33 = scmp.eq.s32.totalorder %s16, 1
    %p34 = por %p32, %p33
    %p35 = scmp.ne.s32.totalorder %s24, %s25
    %p36 = scmp.eq.s32.totalorder %s16, 0
    %p37 = por %p35, %p36
    %p38 = scmp.ne.s32.totalorder %s24, %s25
    %p39 = scmp.eq.s32.totalorder %s17, 1
    %p40 = por %p38, %p39
    %p42 = scmp.ne.s32.totalorder %s25, %s41
    %p43 = scmp.eq.s32.totalorder %s17, 0
    %p44 = por %p42, %p43
    %s46 = sadd.s32 %s45, 1
    %p49 = scmp.eq.s32.totalorder %s11, 1
    %p50 = scmp.ne.s32.totalorder %s45, %s47
    %p51 = scmp.eq.s32.totalorder %s11, 0
    %p52 = por %p50, %p51
    %p53 = scmp.ne.s32.totalorder %s45, %s47
    %p54 = scmp.eq.s32.totalorder %s16, 1
    %p55 = por %p53, %p54
    %p56 = scmp.ne.s32.totalorder %s47, %s48
    %p57 = scmp.eq.s32.totalorder %s16, 0
    %p58 = por %p56, %p57
    %p59 = scmp.ne.s32.totalorder %s47, %s48
    %p60 = scmp.eq.s32.totalorder %s17, 1
    %p61 = por %p59, %p60
    %p63 = scmp.ne.s32.totalorder %s48, %s62
    %p64 = scmp.eq.s32.totalorder %s17, 0
    %p65 = por %p63, %p64
    %s67 = sadd.s32 %s66, 1
    %p70 = scmp.eq.s32.totalorder %s11, 1
    %p71 = scmp.ne.s32.totalorder %s66, %s68
    %p72 = scmp.eq.s32.totalorder %s11, 0
    %p73 = por %p71, %p72
    %p74 = scmp.ne.s32.totalorder %s66, %s68
    %p75 = scmp.eq.s32.totalorder %s16, 1
    %p76 = por %p74, %p75
    %p77 = scmp.ne.s32.totalorder %s68, %s69
    %p78 = scmp.eq.s32.totalorder %s16, 0
    %p79 = por %p77, %p78
    %p80 = scmp.ne.s32.totalorder %s68, %s69
    %p81 = scmp.eq.s32.totalorder %s17, 1
    %p82 = por %p80, %p81
    %p84 = scmp.ne.s32.totalorder %s69, %s83
    %p85 = scmp.eq.s32.totalorder %s17, 0
    %p86 = por %p84, %p85
    %s88 = sadd.s32 %s87, 1
    %p91 = scmp.eq.s32.totalorder %s11, 1
    %p92 = scmp.ne.s32.totalorder %s87, %s89
    %p93 = scmp.eq.s32.totalorder %s11, 0
    %p94 = por %p92, %p93
    %p95 = scmp.ne.s32.totalorder %s87, %s89
    %p96 = scmp.eq.s32.totalorder %s16, 1
    %p97 = por %p95, %p96
    %p98 = scmp.ne.s32.totalorder %s89, %s90
    %p99 = scmp.eq.s32.totalorder %s16, 0
    %p100 = por %p98, %p99
    %p101 = scmp.ne.s32.totalorder %s89, %s90
    %p102 = scmp.eq.s32.totalorder %s17, 1
    %p103 = por %p101, %p102
    %p105 = scmp.ne.s32.totalorder %s90, %s104
    %p106 = scmp.eq.s32.totalorder %s17, 0
    %p107 = por %p105, %p106
    %s109 = sadd.s32 %s108, 1
    %p112 = scmp.eq.s32.totalorder %s11, 1
    %p113 = scmp.ne.s32.totalorder %s108, %s110
    %p114 = scmp.eq.s32.totalorder %s11, 0
    %p115 = por %p113, %p114
    %p116 = scmp.ne.s32.totalorder %s108, %s110
    %p117 = scmp.eq.s32.totalorder %s16, 1
    %p118 = por %p116, %p117
    %p119 = scmp.ne.s32.totalorder %s110, %s111
    %p120 = scmp.eq.s32.totalorder %s16, 0
    %p121 = por %p119, %p120
    %p122 = scmp.ne.s32.totalorder %s110, %s111
    %p123 = scmp.eq.s32.totalorder %s17, 1
    %p124 = por %p122, %p123
    %p126 = scmp.ne.s32.totalorder %s111, %s125
    %p127 = scmp.eq.s32.totalorder %s17, 0
    %p128 = por %p126, %p127
    %s129 = ssub.s32 %s11, %s18
    %p130 = scmp.eq.s32.totalorder %s129, 0
    %s132 = sadd.s32 %s131, 1
    %s133 = scalar_select %p130, %s131, %s132
    %p136 = pneg %p130
    %p137 = scmp.eq.s32.totalorder %s11, 1
    %p138 = por %p136, %p137
    %p139 = scmp.ne.s32.totalorder %s131, %s134
    %p140 = scmp.eq.s32.totalorder %s11, 0
    %p141 = por %p139, %p140
    %p142 = scmp.ne.s32.totalorder %s131, %s134
    %p143 = scmp.eq.s32.totalorder %s16, 1
    %p144 = por %p142, %p143
    %p145 = scmp.ne.s32.totalorder %s134, %s135
    %p146 = scmp.eq.s32.totalorder %s16, 0
    %p147 = por %p145, %p146
    %p148 = scmp.ne.s32.totalorder %s134, %s135
    %p149 = scmp.eq.s32.totalorder %s17, 1
    %p150 = por %p148, %p149
    %p152 = scmp.ne.s32.totalorder %s135, %s151
    %p153 = scmp.eq.s32.totalorder %s17, 0
    %p154 = por %p152, %p153
    %p155 = scmp.le.s32.totalorder 1, %s11
    %p156 = scmp.lt.s32.totalorder %s11, 3
    %p157 = pnand %p155, %p156
    %p158 = pneg %p157
    // Predicated region
    $region9: #{vae_encoder.1} parent=5 // pred_check
      _
    $region10: #{vae_encoder.1} parent=5 // pred_check_branch
      %160 = sbr.rel (%p157) target = $region12
    $region11: #{vae_encoder.1} parent=5 // pred_region
      %s161 = ssub.s32 %s11, 1
      // Predicated region
      $region13: #{vae_encoder.1} parent=11 // pred_check
        %p162 = pneg %p58
      $region14: #{vae_encoder.1} parent=11 // pred_check_branch
        %164 = sbr.rel (%p162) target = $region16
      $region15: #{vae_encoder.1} parent=11 // pred_region
        _
      $region16: #{vae_encoder.1} parent=11 // pred_fallthru
        _
      // Predicated region
      $region17: #{vae_encoder.1} parent=11 // pred_check
        %p165 = pneg %p79
      $region18: #{vae_encoder.1} parent=11 // pred_check_branch
        %167 = sbr.rel (%p165) target = $region20
      $region19: #{vae_encoder.1} parent=11 // pred_region
        _
      $region20: #{vae_encoder.1} parent=11 // pred_fallthru
        _
      // Predicated region
      $region21: #{vae_encoder.1} parent=11 // pred_check
        %p168 = pneg %p100
      $region22: #{vae_encoder.1} parent=11 // pred_check_branch
        %170 = sbr.rel (%p168) target = $region24
      $region23: #{vae_encoder.1} parent=11 // pred_region
        _
      $region24: #{vae_encoder.1} parent=11 // pred_fallthru
        _
      // Predicated region
      $region25: #{vae_encoder.1} parent=11 // pred_check
        %p171 = pneg %p121
      $region26: #{vae_encoder.1} parent=11 // pred_check_branch
        %173 = sbr.rel (%p171) target = $region28
      $region27: #{vae_encoder.1} parent=11 // pred_region
        _
      $region28: #{vae_encoder.1} parent=11 // pred_fallthru
        _
    $region12: #{vae_encoder.1} parent=5 // pred_fallthru
      _
    %p174 = scmp.lt.s32.totalorder %s11, 2
    // Predicated region
    $region29: #{vae_encoder.1} parent=5 // pred_check
      %p175 = pneg %p174
    $region30: #{vae_encoder.1} parent=5 // pred_check_branch
      %177 = sbr.rel (%p175) target = $region32
    $region31: #{vae_encoder.1} parent=5 // pred_region
      // Predicated region
      $region33: #{vae_encoder.1} parent=31 // pred_check
        %p178 = pneg %p31
      $region34: #{vae_encoder.1} parent=31 // pred_check_branch
        %180 = sbr.rel (%p178) target = $region36
      $region35: #{vae_encoder.1} parent=31 // pred_region
        %s181 = smul.u32 32, %s11
        %p182 = scmp.lt.s32.totalorder %s181, 63
        %s183 = scalar_select %p182, %s181, 63
        %s184 = smul.addr %s183, 4
        %s185 = scalar_lea.vmem %s0, %s184
        %s186 = smul.u32 32, %s11
      $region36: #{vae_encoder.1} parent=31 // pred_fallthru
        _
    $region32: #{vae_encoder.1} parent=5 // pred_fallthru
      _
    %p187 = scmp.le.s32.totalorder 1, %s11
    %p188 = scmp.lt.s32.totalorder %s11, 3
    %p189 = pnand %p187, %p188
    %p190 = pneg %p189
    // Predicated region
    $region37: #{vae_encoder.1} parent=5 // pred_check
      _
    $region38: #{vae_encoder.1} parent=5 // pred_check_branch
      %192 = sbr.rel (%p189) target = $region40
    $region39: #{vae_encoder.1} parent=5 // pred_region
      %s193 = ssub.s32 %s11, 1
      %s194 = smul.u32 32, %s16
      %p195 = scmp.lt.s32.totalorder %s194, 63
      %s196 = scalar_select %p195, %s194, 63
      %s197 = smul.addr %s196, 4
      %s198 = scalar_lea.vmem %s0, %s197
      %p199 = pneg %p37
      %p200 = pneg %p34
      %p201 = pneg %p58
      %p202 = pneg %p55
      %p203 = pneg %p79
      %p204 = pneg %p76
      %p205 = pneg %p100
      %p206 = pneg %p97
      %p207 = pneg %p121
      %p208 = pneg %p118
      %p209 = pneg %p147
      %p210 = pneg %p144
      %s211 = smul.u32 32, %s16
      %p212 = scmp.lt.s32.totalorder %s211, 63
      %s213 = scalar_select %p212, %s211, 63
      %s214 = smul.addr %s213, 8
      %s215 = scalar_lea.vmem %s5, %s214
      %s216 = smul.u32 32, %s16
      %p217 = scmp.lt.s32.totalorder %s216, 63
      %s218 = scalar_select %p217, %s216, 63
      %s219 = smul.addr %s218, 4
      %s220 = scalar_lea.vmem %s0, %s219
      %s221 = smul.u32 32, %s16
      %s222 = smul.u32 32, %s16
      %p223 = scmp.lt.s32.totalorder %s222, 63
      %s224 = scalar_select %p223, %s222, 63
      %s225 = smul.addr %s224, 8
      %s226 = scalar_lea.vmem %s5, %s225
      %s227 = smul.u32 32, %s16
      %v229 = vld [vmem:[%s220] sm:$0xf]
      %v230 = vld [vmem:[%s220 + $0x4] sm:$0xf]
      %v231 = vld [vmem:[%s220 + $0x8] sm:$0xf]
      %v232 = vld [vmem:[%s220 + $0xc] sm:$0xf]
      %v233 = vld [vmem:[%s220 + $0x10] sm:$0xf]
      %v234 = vld [vmem:[%s220 + $0x14] sm:$0xf]
      %v235 = vld [vmem:[%s220 + $0x18] sm:$0xf]
      %v236 = vld [vmem:[%s220 + $0x1c] sm:$0xf]
      %v237 = vld [vmem:[%s220 + $0x20] sm:$0xf]
      %v238 = vld [vmem:[%s220 + $0x24] sm:$0xf]
      %v239 = vld [vmem:[%s220 + $0x28] sm:$0xf]
      %v240 = vld [vmem:[%s220 + $0x2c] sm:$0xf]
      %v241 = vld [vmem:[%s220 + $0x30] sm:$0xf]
      %v242 = vld [vmem:[%s220 + $0x34] sm:$0xf]
      %v243 = vld [vmem:[%s220 + $0x38] sm:$0xf]
      %v244 = vld [vmem:[%s220 + $0x3c] sm:$0xf]
      %v245 = vld [vmem:[%s220 + $0x40] sm:$0xf]
      %v246 = vld [vmem:[%s220 + $0x44] sm:$0xf]
      %v247 = vld [vmem:[%s220 + $0x48] sm:$0xf]
      %v248 = vld [vmem:[%s220 + $0x4c] sm:$0xf]
      %v249 = vld [vmem:[%s220 + $0x50] sm:$0xf]
      %v250 = vld [vmem:[%s220 + $0x54] sm:$0xf]
      %v251 = vld [vmem:[%s220 + $0x58] sm:$0xf]
      %v252 = vld [vmem:[%s220 + $0x5c] sm:$0xf]
      %v253 = vld [vmem:[%s220 + $0x60] sm:$0xf]
      %v254 = vld [vmem:[%s220 + $0x64] sm:$0xf]
      %v255 = vld [vmem:[%s220 + $0x68] sm:$0xf]
      %v256 = vld [vmem:[%s220 + $0x6c] sm:$0xf]
      %v257 = vld [vmem:[%s220 + $0x70] sm:$0xf]
      %v258 = vld [vmem:[%s220 + $0x74] sm:$0xf]
      %v259 = vld [vmem:[%s220 + $0x78] sm:$0xf]
      %v260 = vld [vmem:[%s220 + $0x7c] sm:$0xf]
      %v261 = vld [vmem:[%s1] sm:$0xf]
      %v262 = vld [vmem:[%s1 + $0x4] sm:$0xf]
      %v263 = vld [vmem:[%s2] sm:$0x1]
      %v265 = vlaneseq
      %v266 = vshrl.u32 %v265, 7
      %v267 = vsub.s32 0, %v266
      %v268 = vrot.slane %v263, %v267
      %v302 = vunpack.c.l.b16 %v229
      %v303 = vunpack.c.l.b16 %v230
      %v304 = vunpack.c.l.b16 %v231
      %v305 = vunpack.c.l.b16 %v232
      %v306 = vunpack.c.l.b16 %v233
      %v307 = vunpack.c.l.b16 %v234
      %v308 = vunpack.c.l.b16 %v235
      %v309 = vunpack.c.l.b16 %v236
      %v310 = vunpack.c.l.b16 %v237
      %v311 = vunpack.c.l.b16 %v238
      %v312 = vunpack.c.l.b16 %v239
      %v313 = vunpack.c.l.b16 %v240
      %v314 = vunpack.c.l.b16 %v241
      %v315 = vunpack.c.l.b16 %v242
      %v316 = vunpack.c.l.b16 %v243
      %v317 = vunpack.c.l.b16 %v244
      %v318 = vunpack.c.l.b16 %v245
      %v319 = vunpack.c.l.b16 %v246
      %v320 = vunpack.c.l.b16 %v247
      %v321 = vunpack.c.l.b16 %v248
      %v322 = vunpack.c.l.b16 %v249
      %v323 = vunpack.c.l.b16 %v250
      %v324 = vunpack.c.l.b16 %v251
      %v325 = vunpack.c.l.b16 %v252
      %v326 = vunpack.c.l.b16 %v253
      %v327 = vunpack.c.l.b16 %v254
      %v328 = vunpack.c.l.b16 %v255
      %v329 = vunpack.c.l.b16 %v256
      %v330 = vunpack.c.l.b16 %v257
      %v331 = vunpack.c.l.b16 %v258
      %v332 = vunpack.c.l.b16 %v259
      %v333 = vunpack.c.l.b16 %v260
      %v334 = vpack.c.b16 %v303, %v302
      %v335 = vpack.c.b16 %v305, %v304
      %v336 = vpack.c.b16 %v307, %v306
      %v337 = vpack.c.b16 %v309, %v308
      %v338 = vpack.c.b16 %v311, %v310
      %v339 = vpack.c.b16 %v313, %v312
      %v340 = vpack.c.b16 %v315, %v314
      %v341 = vpack.c.b16 %v317, %v316
      %v342 = vpack.c.b16 %v319, %v318
      %v343 = vpack.c.b16 %v321, %v320
      %v344 = vpack.c.b16 %v323, %v322
      %v345 = vpack.c.b16 %v325, %v324
      %v346 = vpack.c.b16 %v327, %v326
      %v347 = vpack.c.b16 %v329, %v328
      %v348 = vpack.c.b16 %v331, %v330
      %v349 = vpack.c.b16 %v333, %v332
      %v352 = vunpack.c.l.b16 %v261
      %v353 = vunpack.c.l.b16 %v262
      %v354 = vpack.c.b16 %v353, %v352
      %vm356 = vcmask 130048
      %v358 = vsel %vm356, %v334, 0
      %v361 = vsel %vm356, %v335, 0
      %v364 = vsel %vm356, %v336, 0
      %v367 = vsel %vm356, %v337, 0
      %v370 = vsel %vm356, %v338, 0
      %v373 = vsel %vm356, %v339, 0
      %v376 = vsel %vm356, %v340, 0
      %v379 = vsel %vm356, %v341, 0
      %v382 = vsel %vm356, %v342, 0
      %v385 = vsel %vm356, %v343, 0
      %v388 = vsel %vm356, %v344, 0
      %v391 = vsel %vm356, %v345, 0
      %v394 = vsel %vm356, %v346, 0
      %v397 = vsel %vm356, %v347, 0
      %v400 = vsel %vm356, %v348, 0
      %v403 = vsel %vm356, %v349, 0
      %405 = vmatprep.subr.bf16.mxu0 0
      %406 = vmatpush1.bf16.msra.mxu0 0
      %407 = vmatprep.subr.bf16.mxu0 0
      %408 = vmatpush1.bf16.msra.mxu0 0
      %409 = vmatprep.subr.bf16.mxu0 0
      %410 = vmatpush1.bf16.msra.mxu0 0
      %411 = vmatprep.subr.bf16.mxu0 0
      %412 = vmatpush1.bf16.msra.mxu0 0
      %413 = vmatprep.subr.bf16.mxu0 0
      %414 = vmatpush1.bf16.msra.mxu0 0
      %415 = vmatprep.subr.bf16.mxu0 0
      %416 = vmatpush1.bf16.msra.mxu0 0
      %417 = vmatprep.subr.bf16.mxu0 0
      %418 = vmatpush1.bf16.msra.mxu0 0
      %419 = vmatprep.subr.bf16.mxu0 0
      %420 = vmatpush1.bf16.msra.mxu0 %v354
      %421 = vmatprep.subr.bf16.mxu0 0
      %422 = vmatpush2.bf16.msra.mxu0 0
      %423 = vmatprep.subr.bf16.mxu0 0
      %424 = vmatpush2.bf16.msra.mxu0 0
      %425 = vmatprep.subr.bf16.mxu0 0
      %426 = vmatpush2.bf16.msra.mxu0 0
      %427 = vmatprep.subr.bf16.mxu0 0
      %428 = vmatpush2.bf16.msra.mxu0 0
      %429 = vmatprep.subr.bf16.mxu0 0
      %430 = vmatpush2.bf16.msra.mxu0 0
      %431 = vmatprep.subr.bf16.mxu0 0
      %432 = vmatpush2.bf16.msra.mxu0 0
      %433 = vmatprep.subr.bf16.mxu0 0
      %434 = vmatpush2.bf16.msra.mxu0 0
      %435 = vmatprep.subr.bf16.mxu0 0
      %436 = vmatpush2.bf16.msra.mxu0 0
      %437 = vmatprep.mubr.bf16.mxu0 0
      %438 = vmatmul.mubr.bf16.gmra.mxu0 %v358
      %v439 = vpop.f32.mrf.mxu0
      %v440 = vadd.f32 %v268, %v439
      %v441 = vpop.f32.mrf.mxu0
      %v442 = vpop.f32.mrf.mxu0
      %v443 = vadd.f32 %v268, %v442
      %v444 = vpop.f32.mrf.mxu0
      %445 = vmatprep.mubr.bf16.mxu0 0
      %446 = vmatmul.mubr.bf16.gmra.mxu0 %v361
      %v447 = vpop.f32.mrf.mxu0
      %v448 = vadd.f32 %v268, %v447
      %v449 = vpop.f32.mrf.mxu0
      %v450 = vpop.f32.mrf.mxu0
      %v451 = vadd.f32 %v268, %v450
      %v452 = vpop.f32.mrf.mxu0
      %453 = vmatprep.mubr.bf16.mxu0 0
      %454 = vmatmul.mubr.bf16.gmra.mxu0 %v364
      %v455 = vpop.f32.mrf.mxu0
      %v456 = vadd.f32 %v268, %v455
      %v457 = vpop.f32.mrf.mxu0
      %v458 = vpop.f32.mrf.mxu0
      %v459 = vadd.f32 %v268, %v458
      %v460 = vpop.f32.mrf.mxu0
      %461 = vmatprep.mubr.bf16.mxu0 0
      %462 = vmatmul.mubr.bf16.gmra.mxu0 %v367
      %v463 = vpop.f32.mrf.mxu0
      %v464 = vadd.f32 %v268, %v463
      %v465 = vpop.f32.mrf.mxu0
      %v466 = vpop.f32.mrf.mxu0
      %v467 = vadd.f32 %v268, %v466
      %v468 = vpop.f32.mrf.mxu0
      %469 = vmatprep.mubr.bf16.mxu0 0
      %470 = vmatmul.mubr.bf16.gmra.mxu0 %v370
      %v471 = vpop.f32.mrf.mxu0
      %v472 = vadd.f32 %v268, %v471
      %v473 = vpop.f32.mrf.mxu0
      %v474 = vpop.f32.mrf.mxu0
      %v475 = vadd.f32 %v268, %v474
      %v476 = vpop.f32.mrf.mxu0
      %477 = vmatprep.mubr.bf16.mxu0 0
      %478 = vmatmul.mubr.bf16.gmra.mxu0 %v373
      %v479 = vpop.f32.mrf.mxu0
      %v480 = vadd.f32 %v268, %v479
      %v481 = vpop.f32.mrf.mxu0
      %v482 = vpop.f32.mrf.mxu0
      %v483 = vadd.f32 %v268, %v482
      %v484 = vpop.f32.mrf.mxu0
      %485 = vmatprep.mubr.bf16.mxu0 0
      %486 = vmatmul.mubr.bf16.gmra.mxu0 %v376
      %v487 = vpop.f32.mrf.mxu0
      %v488 = vadd.f32 %v268, %v487
      %v489 = vpop.f32.mrf.mxu0
      %v490 = vpop.f32.mrf.mxu0
      %v491 = vadd.f32 %v268, %v490
      %v492 = vpop.f32.mrf.mxu0
      %493 = vmatprep.mubr.bf16.mxu0 0
      %494 = vmatmul.mubr.bf16.gmra.mxu0 %v379
      %v495 = vpop.f32.mrf.mxu0
      %v496 = vadd.f32 %v268, %v495
      %v497 = vpop.f32.mrf.mxu0
      %v498 = vpop.f32.mrf.mxu0
      %v499 = vadd.f32 %v268, %v498
      %v500 = vpop.f32.mrf.mxu0
      %501 = vmatprep.mubr.bf16.mxu0 0
      %502 = vmatmul.mubr.bf16.gmra.mxu0 %v382
      %v503 = vpop.f32.mrf.mxu0
      %v504 = vadd.f32 %v268, %v503
      %v505 = vpop.f32.mrf.mxu0
      %v506 = vpop.f32.mrf.mxu0
      %v507 = vadd.f32 %v268, %v506
      %v508 = vpop.f32.mrf.mxu0
      %509 = vmatprep.mubr.bf16.mxu0 0
      %510 = vmatmul.mubr.bf16.gmra.mxu0 %v385
      %v511 = vpop.f32.mrf.mxu0
      %v512 = vadd.f32 %v268, %v511
      %v513 = vpop.f32.mrf.mxu0
      %v514 = vpop.f32.mrf.mxu0
      %v515 = vadd.f32 %v268, %v514
      %v516 = vpop.f32.mrf.mxu0
      %517 = vmatprep.mubr.bf16.mxu0 0
      %518 = vmatmul.mubr.bf16.gmra.mxu0 %v388
      %v519 = vpop.f32.mrf.mxu0
      %v520 = vadd.f32 %v268, %v519
      %v521 = vpop.f32.mrf.mxu0
      %v522 = vpop.f32.mrf.mxu0
      %v523 = vadd.f32 %v268, %v522
      %v524 = vpop.f32.mrf.mxu0
      %525 = vmatprep.mubr.bf16.mxu0 0
      %526 = vmatmul.mubr.bf16.gmra.mxu0 %v391
      %v527 = vpop.f32.mrf.mxu0
      %v528 = vadd.f32 %v268, %v527
      %v529 = vpop.f32.mrf.mxu0
      %v530 = vpop.f32.mrf.mxu0
      %v531 = vadd.f32 %v268, %v530
      %v532 = vpop.f32.mrf.mxu0
      %533 = vmatprep.mubr.bf16.mxu0 0
      %534 = vmatmul.mubr.bf16.gmra.mxu0 %v394
      %v535 = vpop.f32.mrf.mxu0
      %v536 = vadd.f32 %v268, %v535
      %v537 = vpop.f32.mrf.mxu0
      %v538 = vpop.f32.mrf.mxu0
      %v539 = vadd.f32 %v268, %v538
      %v540 = vpop.f32.mrf.mxu0
      %541 = vmatprep.mubr.bf16.mxu0 0
      %542 = vmatmul.mubr.bf16.gmra.mxu0 %v397
      %v543 = vpop.f32.mrf.mxu0
      %v544 = vadd.f32 %v268, %v543
      %v545 = vpop.f32.mrf.mxu0
      %v546 = vpop.f32.mrf.mxu0
      %v547 = vadd.f32 %v268, %v546
      %v548 = vpop.f32.mrf.mxu0
      %549 = vmatprep.mubr.bf16.mxu0 0
      %550 = vmatmul.mubr.bf16.gmra.mxu0 %v400
      %v551 = vpop.f32.mrf.mxu0
      %v552 = vadd.f32 %v268, %v551
      %v553 = vpop.f32.mrf.mxu0
      %v554 = vpop.f32.mrf.mxu0
      %v555 = vadd.f32 %v268, %v554
      %v556 = vpop.f32.mrf.mxu0
      %557 = vmatprep.mubr.bf16.mxu0 0
      %558 = vmatmul.mubr.bf16.gmra.mxu0 %v403
      %v559 = vpop.f32.mrf.mxu0
      %v560 = vadd.f32 %v268, %v559
      %v561 = vpop.f32.mrf.mxu0
      %v562 = vpop.f32.mrf.mxu0
      %v563 = vadd.f32 %v268, %v562
      %v564 = vpop.f32.mrf.mxu0
      %565 = vdwg.mxu0
      %v566 = vtanh.pop %v440
      %v567 = vtanh.pop %v443
      %v568 = vtanh.pop %v448
      %v569 = vtanh.pop %v451
      %v570 = vtanh.pop %v456
      %v571 = vtanh.pop %v459
      %v572 = vtanh.pop %v464
      %v573 = vtanh.pop %v467
      %v574 = vtanh.pop %v472
      %v575 = vtanh.pop %v475
      %v576 = vtanh.pop %v480
      %v577 = vtanh.pop %v483
      %v578 = vtanh.pop %v488
      %v579 = vtanh.pop %v491
      %v580 = vtanh.pop %v496
      %v581 = vtanh.pop %v499
      %v582 = vtanh.pop %v504
      %v583 = vtanh.pop %v507
      %v584 = vtanh.pop %v512
      %v585 = vtanh.pop %v515
      %v586 = vtanh.pop %v520
      %v587 = vtanh.pop %v523
      %v588 = vtanh.pop %v528
      %v589 = vtanh.pop %v531
      %v590 = vtanh.pop %v536
      %v591 = vtanh.pop %v539
      %v592 = vtanh.pop %v544
      %v593 = vtanh.pop %v547
      %v594 = vtanh.pop %v552
      %v595 = vtanh.pop %v555
      %v596 = vtanh.pop %v560
      %v597 = vtanh.pop %v563
      %v598 = vpack.c.bf16 %v567, %v566
      %v599 = vpack.c.bf16 %v569, %v568
      %v600 = vpack.c.bf16 %v571, %v570
      %v601 = vpack.c.bf16 %v573, %v572
      %v602 = vpack.c.bf16 %v575, %v574
      %v603 = vpack.c.bf16 %v577, %v576
      %v604 = vpack.c.bf16 %v579, %v578
      %v605 = vpack.c.bf16 %v581, %v580
      %v606 = vpack.c.bf16 %v583, %v582
      %v607 = vpack.c.bf16 %v585, %v584
      %v608 = vpack.c.bf16 %v587, %v586
      %v609 = vpack.c.bf16 %v589, %v588
      %v610 = vpack.c.bf16 %v591, %v590
      %v611 = vpack.c.bf16 %v593, %v592
      %v612 = vpack.c.bf16 %v595, %v594
      %v613 = vpack.c.bf16 %v597, %v596
      %v614 = vld [vmem:[%s3] sm:$0xf]
      %v615 = vld [vmem:[%s3 + $0x4] sm:$0xf]
      %v616 = vld [vmem:[%s3 + $0x8] sm:$0xf]
      %v617 = vld [vmem:[%s3 + $0xc] sm:$0xf]
      %v618 = vld [vmem:[%s4] sm:$0x1]
      %v620 = vlaneseq
      %v621 = vshrl.u32 %v620, 7
      %v622 = vsub.s32 0, %v621
      %v623 = vrot.slane %v618, %v622
      %v629 = vunpack.c.l.b16 %v614
      %v630 = vunpack.c.l.b16 %v615
      %v631 = vunpack.c.l.b16 %v616
      %v632 = vunpack.c.l.b16 %v617
      %v633 = vpack.c.b16 %v630, %v629
      %v634 = vpack.c.b16 %v632, %v631
      %vm637 = vcmask 261120
      %v639 = vsel %vm637, %v598, 0
      %v642 = vsel %vm637, %v599, 0
      %v645 = vsel %vm637, %v600, 0
      %v648 = vsel %vm637, %v601, 0
      %v651 = vsel %vm637, %v602, 0
      %v654 = vsel %vm637, %v603, 0
      %v657 = vsel %vm637, %v604, 0
      %v660 = vsel %vm637, %v605, 0
      %v663 = vsel %vm637, %v606, 0
      %v666 = vsel %vm637, %v607, 0
      %v669 = vsel %vm637, %v608, 0
      %v672 = vsel %vm637, %v609, 0
      %v675 = vsel %vm637, %v610, 0
      %v678 = vsel %vm637, %v611, 0
      %v681 = vsel %vm637, %v612, 0
      %v684 = vsel %vm637, %v613, 0
      %686 = vmatprep.subr.bf16.mxu0 0
      %687 = vmatpush1.bf16.msra.mxu0 0
      %688 = vmatprep.subr.bf16.mxu0 0
      %689 = vmatpush1.bf16.msra.mxu0 0
      %690 = vmatprep.subr.bf16.mxu0 0
      %691 = vmatpush1.bf16.msra.mxu0 0
      %692 = vmatprep.subr.bf16.mxu0 0
      %693 = vmatpush1.bf16.msra.mxu0 0
      %694 = vmatprep.subr.bf16.mxu0 0
      %695 = vmatpush1.bf16.msra.mxu0 0
      %696 = vmatprep.subr.bf16.mxu0 0
      %697 = vmatpush1.bf16.msra.mxu0 0
      %698 = vmatprep.subr.bf16.mxu0 0
      %699 = vmatpush1.bf16.msra.mxu0 %v634
      %700 = vmatprep.subr.bf16.mxu0 0
      %701 = vmatpush1.bf16.msra.mxu0 %v633
      %702 = vmatprep.subr.bf16.mxu0 0
      %703 = vmatpush2.bf16.msra.mxu0 0
      %704 = vmatprep.subr.bf16.mxu0 0
      %705 = vmatpush2.bf16.msra.mxu0 0
      %706 = vmatprep.subr.bf16.mxu0 0
      %707 = vmatpush2.bf16.msra.mxu0 0
      %708 = vmatprep.subr.bf16.mxu0 0
      %709 = vmatpush2.bf16.msra.mxu0 0
      %710 = vmatprep.subr.bf16.mxu0 0
      %711 = vmatpush2.bf16.msra.mxu0 0
      %712 = vmatprep.subr.bf16.mxu0 0
      %713 = vmatpush2.bf16.msra.mxu0 0
      %714 = vmatprep.subr.bf16.mxu0 0
      %715 = vmatpush2.bf16.msra.mxu0 0
      %716 = vmatprep.subr.bf16.mxu0 0
      %717 = vmatpush2.bf16.msra.mxu0 0
      %718 = vmatprep.mubr.bf16.mxu0 0
      %719 = vmatmul.mubr.bf16.gmra.mxu0 %v639
      %v720 = vpop.f32.mrf.mxu0
      %v721 = vadd.f32 %v623, %v720
      %v722 = vpop.f32.mrf.mxu0
      %v723 = vpop.f32.mrf.mxu0
      %v724 = vadd.f32 %v623, %v723
      %v725 = vpop.f32.mrf.mxu0
      %726 = vmatprep.mubr.bf16.mxu0 0
      %727 = vmatmul.mubr.bf16.gmra.mxu0 %v642
      %v728 = vpop.f32.mrf.mxu0
      %v729 = vadd.f32 %v623, %v728
      %v730 = vpop.f32.mrf.mxu0
      %v731 = vpop.f32.mrf.mxu0
      %v732 = vadd.f32 %v623, %v731
      %v733 = vpop.f32.mrf.mxu0
      %734 = vmatprep.mubr.bf16.mxu0 0
      %735 = vmatmul.mubr.bf16.gmra.mxu0 %v645
      %v736 = vpop.f32.mrf.mxu0
      %v737 = vadd.f32 %v623, %v736
      %v738 = vpop.f32.mrf.mxu0
      %v739 = vpop.f32.mrf.mxu0
      %v740 = vadd.f32 %v623, %v739
      %v741 = vpop.f32.mrf.mxu0
      %742 = vmatprep.mubr.bf16.mxu0 0
      %743 = vmatmul.mubr.bf16.gmra.mxu0 %v648
      %v744 = vpop.f32.mrf.mxu0
      %v745 = vadd.f32 %v623, %v744
      %v746 = vpop.f32.mrf.mxu0
      %v747 = vpop.f32.mrf.mxu0
      %v748 = vadd.f32 %v623, %v747
      %v749 = vpop.f32.mrf.mxu0
      %750 = vmatprep.mubr.bf16.mxu0 0
      %751 = vmatmul.mubr.bf16.gmra.mxu0 %v651
      %v752 = vpop.f32.mrf.mxu0
      %v753 = vadd.f32 %v623, %v752
      %v754 = vpop.f32.mrf.mxu0
      %v755 = vpop.f32.mrf.mxu0
      %v756 = vadd.f32 %v623, %v755
      %v757 = vpop.f32.mrf.mxu0
      %758 = vmatprep.mubr.bf16.mxu0 0
      %759 = vmatmul.mubr.bf16.gmra.mxu0 %v654
      %v760 = vpop.f32.mrf.mxu0
      %v761 = vadd.f32 %v623, %v760
      %v762 = vpop.f32.mrf.mxu0
      %v763 = vpop.f32.mrf.mxu0
      %v764 = vadd.f32 %v623, %v763
      %v765 = vpop.f32.mrf.mxu0
      %766 = vmatprep.mubr.bf16.mxu0 0
      %767 = vmatmul.mubr.bf16.gmra.mxu0 %v657
      %v768 = vpop.f32.mrf.mxu0
      %v769 = vadd.f32 %v623, %v768
      %v770 = vpop.f32.mrf.mxu0
      %v771 = vpop.f32.mrf.mxu0
      %v772 = vadd.f32 %v623, %v771
      %v773 = vpop.f32.mrf.mxu0
      %774 = vmatprep.mubr.bf16.mxu0 0
      %775 = vmatmul.mubr.bf16.gmra.mxu0 %v660
      %v776 = vpop.f32.mrf.mxu0
      %v777 = vadd.f32 %v623, %v776
      %v778 = vpop.f32.mrf.mxu0
      %v779 = vpop.f32.mrf.mxu0
      %v780 = vadd.f32 %v623, %v779
      %v781 = vpop.f32.mrf.mxu0
      %782 = vmatprep.mubr.bf16.mxu0 0
      %783 = vmatmul.mubr.bf16.gmra.mxu0 %v663
      %v784 = vpop.f32.mrf.mxu0
      %v785 = vadd.f32 %v623, %v784
      %v786 = vpop.f32.mrf.mxu0
      %v787 = vpop.f32.mrf.mxu0
      %v788 = vadd.f32 %v623, %v787
      %v789 = vpop.f32.mrf.mxu0
      %790 = vmatprep.mubr.bf16.mxu0 0
      %791 = vmatmul.mubr.bf16.gmra.mxu0 %v666
      %v792 = vpop.f32.mrf.mxu0
      %v793 = vadd.f32 %v623, %v792
      %v794 = vpop.f32.mrf.mxu0
      %v795 = vpop.f32.mrf.mxu0
      %v796 = vadd.f32 %v623, %v795
      %v797 = vpop.f32.mrf.mxu0
      %798 = vmatprep.mubr.bf16.mxu0 0
      %799 = vmatmul.mubr.bf16.gmra.mxu0 %v669
      %v800 = vpop.f32.mrf.mxu0
      %v801 = vadd.f32 %v623, %v800
      %v802 = vpop.f32.mrf.mxu0
      %v803 = vpop.f32.mrf.mxu0
      %v804 = vadd.f32 %v623, %v803
      %v805 = vpop.f32.mrf.mxu0
      %806 = vmatprep.mubr.bf16.mxu0 0
      %807 = vmatmul.mubr.bf16.gmra.mxu0 %v672
      %v808 = vpop.f32.mrf.mxu0
      %v809 = vadd.f32 %v623, %v808
      %v810 = vpop.f32.mrf.mxu0
      %v811 = vpop.f32.mrf.mxu0
      %v812 = vadd.f32 %v623, %v811
      %v813 = vpop.f32.mrf.mxu0
      %814 = vmatprep.mubr.bf16.mxu0 0
      %815 = vmatmul.mubr.bf16.gmra.mxu0 %v675
      %v816 = vpop.f32.mrf.mxu0
      %v817 = vadd.f32 %v623, %v816
      %v818 = vpop.f32.mrf.mxu0
      %v819 = vpop.f32.mrf.mxu0
      %v820 = vadd.f32 %v623, %v819
      %v821 = vpop.f32.mrf.mxu0
      %822 = vmatprep.mubr.bf16.mxu0 0
      %823 = vmatmul.mubr.bf16.gmra.mxu0 %v678
      %v824 = vpop.f32.mrf.mxu0
      %v825 = vadd.f32 %v623, %v824
      %v826 = vpop.f32.mrf.mxu0
      %v827 = vpop.f32.mrf.mxu0
      %v828 = vadd.f32 %v623, %v827
      %v829 = vpop.f32.mrf.mxu0
      %830 = vmatprep.mubr.bf16.mxu0 0
      %831 = vmatmul.mubr.bf16.gmra.mxu0 %v681
      %v832 = vpop.f32.mrf.mxu0
      %v833 = vadd.f32 %v623, %v832
      %v834 = vpop.f32.mrf.mxu0
      %v835 = vpop.f32.mrf.mxu0
      %v836 = vadd.f32 %v623, %v835
      %v837 = vpop.f32.mrf.mxu0
      %838 = vmatprep.mubr.bf16.mxu0 0
      %839 = vmatmul.mubr.bf16.gmra.mxu0 %v684
      %v840 = vpop.f32.mrf.mxu0
      %v841 = vadd.f32 %v623, %v840
      %v842 = vpop.f32.mrf.mxu0
      %v843 = vpop.f32.mrf.mxu0
      %v844 = vadd.f32 %v623, %v843
      %v845 = vpop.f32.mrf.mxu0
      %846 = vdwg.mxu0
      %847 = vst [vmem:[%s226] sm:$0xff] %v721
      %848 = vst [vmem:[%s226 + $0x8] sm:$0xff] %v724
      %849 = vst [vmem:[%s226 + $0x10] sm:$0xff] %v729
      %850 = vst [vmem:[%s226 + $0x18] sm:$0xff] %v732
      %851 = vst [vmem:[%s226 + $0x20] sm:$0xff] %v737
      %852 = vst [vmem:[%s226 + $0x28] sm:$0xff] %v740
      %853 = vst [vmem:[%s226 + $0x30] sm:$0xff] %v745
      %854 = vst [vmem:[%s226 + $0x38] sm:$0xff] %v748
      %855 = vst [vmem:[%s226 + $0x40] sm:$0xff] %v753
      %856 = vst [vmem:[%s226 + $0x48] sm:$0xff] %v756
      %857 = vst [vmem:[%s226 + $0x50] sm:$0xff] %v761
      %858 = vst [vmem:[%s226 + $0x58] sm:$0xff] %v764
      %859 = vst [vmem:[%s226 + $0x60] sm:$0xff] %v769
      %860 = vst [vmem:[%s226 + $0x68] sm:$0xff] %v772
      %861 = vst [vmem:[%s226 + $0x70] sm:$0xff] %v777
      %862 = vst [vmem:[%s226 + $0x78] sm:$0xff] %v780
      %863 = vst [vmem:[%s226 + $0x80] sm:$0xff] %v785
      %864 = vst [vmem:[%s226 + $0x88] sm:$0xff] %v788
      %865 = vst [vmem:[%s226 + $0x90] sm:$0xff] %v793
      %866 = vst [vmem:[%s226 + $0x98] sm:$0xff] %v796
      %867 = vst [vmem:[%s226 + $0xa0] sm:$0xff] %v801
      %868 = vst [vmem:[%s226 + $0xa8] sm:$0xff] %v804
      %869 = vst [vmem:[%s226 + $0xb0] sm:$0xff] %v809
      %870 = vst [vmem:[%s226 + $0xb8] sm:$0xff] %v812
      %871 = vst [vmem:[%s226 + $0xc0] sm:$0xff] %v817
      %872 = vst [vmem:[%s226 + $0xc8] sm:$0xff] %v820
      %873 = vst [vmem:[%s226 + $0xd0] sm:$0xff] %v825
      %874 = vst [vmem:[%s226 + $0xd8] sm:$0xff] %v828
      %875 = vst [vmem:[%s226 + $0xe0] sm:$0xff] %v833
      %876 = vst [vmem:[%s226 + $0xe8] sm:$0xff] %v836
      %877 = vst [vmem:[%s226 + $0xf0] sm:$0xff] %v841
      %878 = vst [vmem:[%s226 + $0xf8] sm:$0xff] %v844
      %s879 = smul.u32 32, %s16
      %p880 = scmp.lt.s32.totalorder %s879, 63
      %s881 = scalar_select %p880, %s879, 63
      %s882 = smul.addr %s881, 8
      %s883 = scalar_lea.vmem %s5, %s882
      // Predicated region
      $region41: #{vae_encoder.1} parent=39 // pred_check
        %p884 = pneg %p144
      $region42: #{vae_encoder.1} parent=39 // pred_check_branch
        %886 = sbr.rel (%p884) target = $region44
      $region43: #{vae_encoder.1} parent=39 // pred_region
        %s887 = smul.u32 32, %s16
      $region44: #{vae_encoder.1} parent=39 // pred_fallthru
        _
    $region40: #{vae_encoder.1} parent=5 // pred_fallthru
      _
    %p888 = scmp.le.s32.totalorder 2, %s11
    // Predicated region
    $region45: #{vae_encoder.1} parent=5 // pred_check
      %p889 = pneg %p888
    $region46: #{vae_encoder.1} parent=5 // pred_check_branch
      %891 = sbr.rel (%p889) target = $region48
    $region47: #{vae_encoder.1} parent=5 // pred_region
      %s892 = ssub.s32 %s11, 2
      // Predicated region
      $region49: #{vae_encoder.1} parent=47 // pred_check
        %p893 = pneg %p150
      $region50: #{vae_encoder.1} parent=47 // pred_check_branch
        %895 = sbr.rel (%p893) target = $region52
      $region51: #{vae_encoder.1} parent=47 // pred_region
        %s896 = smul.u32 32, %s17
        %p897 = scmp.lt.s32.totalorder %s896, 63
        %s898 = scalar_select %p897, %s896, 63
        %s899 = smul.addr %s898, 8
        %s900 = scalar_lea.vmem %s5, %s899
      $region52: #{vae_encoder.1} parent=47 // pred_fallthru
        _
    $region48: #{vae_encoder.1} parent=5 // pred_fallthru
      _
  $region6: #{vae_encoder.1} parent=0 // loop_footer
    %s15 = sadd.s32 1, %s11
  $region7: #{vae_encoder.1} parent=0 // loop_footer_branch
    %10 = sbr.rel target = $region3
  $region8: #{vae_encoder.1} parent=0 // loop_exit
    _

</llo_original>
